<compile_context>
chip_gen: v7x
topology: tpu7x:2x2x1
jax: 0.10.0
libtpu: 0.0.40
codegen_flags: <defaults>
</compile_context>

<pallas_src>
import functools

import jax
import jax.numpy as jnp
from jax.experimental import pallas as pl
from jax.experimental.pallas import tpu as pltpu

BN_EPS = 1e-5


def coordatt_kernel(x_ref, pool_ref, inv_ref, exph_ref, expw_ref,
                    w1_ref, b1_ref, w2_ref, b2_ref, w3_ref, b3_ref,
                    o_ref, *, h, w):
    """One grid step: a (bt*C, H*W) lane-dense row block of the batch."""
    x = x_ref[...]                                           # (bt*c, hw)
    xd = x.dtype

    # --- both adaptive average pools of the whole tile in ONE MXU matmul;
    #     inv_ref turns the 0/1-matmul sums into means (1/W | 1/H columns). ---
    pooled = jnp.dot(x, pool_ref[...],
                     preferred_element_type=jnp.float32) * inv_ref[...]   # (bt*c, h+w)

    # --- conv1 (1x1, BN folded, block-diagonal over the batch tile) + h_swish ---
    y = jnp.dot(w1_ref[...], pooled,
                preferred_element_type=jnp.float32) + b1_ref[...]         # (bt*mip, h+w)
    y = y * jnp.clip(y + 3.0, 0.0, 6.0) * (1.0 / 6.0)

    # --- conv2 / conv3 + sigmoid, each only on its half of the positions ---
    gh = jax.nn.sigmoid(
        jnp.dot(w2_ref[...], y[:, :h],
                preferred_element_type=jnp.float32) + b2_ref[...])        # (bt*c, h)
    gw = jax.nn.sigmoid(
        jnp.dot(w3_ref[...], y[:, h:],
                preferred_element_type=jnp.float32) + b3_ref[...])        # (bt*c, w)

    # --- expand the gates back to the flat H*W axis (0/1 matmul == exact
    #     broadcast) and apply; the big elementwise product stays in the input
    #     dtype and is stored lane-dense in one pass. ---
    gate_h = jnp.dot(gh.astype(xd), exph_ref[...])           # (bt*c, hw)
    gate_w = jnp.dot(gw.astype(xd), expw_ref[...])           # (bt*c, hw)
    o_ref[...] = (x * gate_w * gate_h).astype(o_ref.dtype)


def _round_up(a, m):
    return -(-a // m) * m


def _tpu_mem_model():
    """Returns (vmem_limit_bytes, two_tensorcores) for the local TPU."""
    vmem_cap = 64 * 1024 * 1024                  # conservative default (v7x per-TC)
    try:
        vmem_cap = int(pltpu.get_tpu_info().vmem_capacity_bytes)
    except Exception:
        pass
    # Heuristic: <= 80 MiB per-core VMEM -> v7x-class part with 2 TensorCores.
    two_cores = vmem_cap <= 80 * 1024 * 1024
    vmem_limit = max(min(int(vmem_cap * 0.85), vmem_cap - 8 * 1024 * 1024),
                     48 * 1024 * 1024)
    return vmem_limit, two_cores


def _pick_batch_tile(n, c, hw, h, w, mip, itemsize, vmem_limit, two_cores):
    """Largest batch tile whose block + constants + temporaries fit VMEM.

    On two-TensorCore parts prefer an even number of (>=2) grid steps so the
    'parallel' batch axis splits evenly across cores; on single-core parts take
    the largest divisor of n that fits (fewer grid steps on the mem-bound path).
    """
    lanes_hw = _round_up(hw, 128)
    lanes_hp = _round_up(h + w, 128)
    # Grid-invariant constants (double-buffered by the pipeline).
    const_bytes = 2 * itemsize * (_round_up(hw, 8) * lanes_hp     # pool_mat
                                  + _round_up(h, 8) * lanes_hw    # exp_h
                                  + _round_up(w, 8) * lanes_hw)   # exp_w

    def fits(bt):
        rows = bt * c
        blk = _round_up(rows, 8) * lanes_hw * itemsize
        # Block-diagonal f32 conv weights (double-buffered, grow with bt).
        kron_w = 4 * (_round_up(bt * mip, 8) * _round_up(bt * c, 128)
                      + 2 * _round_up(bt * c, 8) * _round_up(bt * mip, 128))
        # in + out blocks (double-buffered) + ~3 block-sized f32/xd temporaries
        # (gates, products) + weights + fixed headroom for biases / misc.
        total = const_bytes + blk * (2 + 2 + 3) + 2 * kron_w + (4 << 20)
        return total <= vmem_limit

    divisors = [d for d in range(1, n + 1) if n % d == 0]
    # Block row count must be divisible by 8 unless the block covers all rows.
    valid = [d for d in divisors if (d * c) % 8 == 0 or d == n]
    fitting = [d for d in valid if fits(d)]
    if not fitting:
        # TODO(synk): strided-reduction pooling path for very large H*W so a
        # single image block never has to exceed the VMEM budget.
        raise ValueError("CoordAtt Pallas kernel: a single image block exceeds "
                         "the VMEM budget; spatial size too large for this path")
    if two_cores and n >= 2:
        even = [d for d in fitting if (n // d) >= 2 and (n // d) % 2 == 0]
        multi = [d for d in fitting if (n // d) >= 2]
        pool = even or multi or fitting
        return max(pool)
    return max(fitting)


def coord_att(x, params):
    n, c, h, w = x.shape
    hw = h * w
    mip = params["w1"].shape[0]
    xd = x.dtype

    # ---- fold BatchNorm (eval) into conv1: w1' = s*w1, b1' = s*(b1-mean)+beta
    scale = params["gamma"] / jnp.sqrt(params["var"] + BN_EPS)        # (mip, 1)
    w1f = params["w1"] * scale                                        # (mip, c)
    b1f = (params["b1"] - params["mean"]) * scale + params["beta"]    # (mip, 1)

    # ---- 0/1 pooling / expansion matrices for the flattened H*W axis.
    q = jnp.arange(hw)
    ph = (q[:, None] // w) == jnp.arange(h)[None, :]                  # (hw, h)
    pw = (q[:, None] % w) == jnp.arange(w)[None, :]                   # (hw, w)
    pool_mat = jnp.concatenate([ph, pw], axis=1).astype(xd)           # (hw, h+w)
    exp_h = ph.T.astype(xd)                                           # (h, hw)
    exp_w = pw.T.astype(xd)                                           # (w, hw)
    # Column scales turning the 0/1-matmul sums into means (kept f32, applied
    # once on the f32 pooled result so low-precision inputs lose nothing).
    inv_cnt = jnp.concatenate(
        [jnp.full((1, h), 1.0 / w, jnp.float32),
         jnp.full((1, w), 1.0 / h, jnp.float32)], axis=1)             # (1, h+w)

    vmem_limit, two_cores = _tpu_mem_model()
    bt = _pick_batch_tile(n, c, hw, h, w, mip, x.dtype.itemsize,
                          vmem_limit, two_cores)
    rows = bt * c
    grid = (n // bt,)

    # ---- block-diagonal 1x1-conv weights so the whole batch tile is one matmul.
    eye = jnp.eye(bt, dtype=jnp.float32)
    w1_bd = jnp.kron(eye, w1f)                                        # (bt*mip, bt*c)
    b1_bd = jnp.tile(b1f, (bt, 1))                                    # (bt*mip, 1)
    w2_bd = jnp.kron(eye, params["w2"])                               # (bt*c, bt*mip)
    b2_bd = jnp.tile(params["b2"], (bt, 1))                           # (bt*c, 1)
    w3_bd = jnp.kron(eye, params["w3"])
    b3_bd = jnp.tile(params["b3"], (bt, 1))

    x2 = x.reshape(n * c, hw)                                         # free (contiguous)

    def const_spec(shape):
        return pl.BlockSpec(shape, lambda i: (0,) * len(shape))

    out2 = pl.pallas_call(
        functools.partial(coordatt_kernel, h=h, w=w),
        out_shape=jax.ShapeDtypeStruct((n * c, hw), xd),
        grid_spec=pltpu.PrefetchScalarGridSpec(
            num_scalar_prefetch=0,
            grid=grid,
            in_specs=[
                pl.BlockSpec((rows, hw), lambda i: (i, 0)),           # x (flattened)
                const_spec((hw, h + w)),                              # pooling matrix
                const_spec((1, h + w)),                               # 1/W | 1/H scales
                const_spec((h, hw)),                                  # h-gate expansion
                const_spec((w, hw)),                                  # w-gate expansion
                const_spec((bt * mip, bt * c)),                       # conv1 w (BN folded)
                const_spec((bt * mip, 1)),                            # conv1 b (BN folded)
                const_spec((bt * c, bt * mip)),                       # conv2 w
                const_spec((bt * c, 1)),                              # conv2 b
                const_spec((bt * c, bt * mip)),                       # conv3 w
                const_spec((bt * c, 1)),                              # conv3 b
            ],
            out_specs=pl.BlockSpec((rows, hw), lambda i: (i, 0)),
        ),
        compiler_params=pltpu.CompilerParams(
            dimension_semantics=("parallel",),
            vmem_limit_bytes=vmem_limit),
    )(x2, pool_mat, inv_cnt, exp_h, exp_w,
      w1_bd, b1_bd, w2_bd, b2_bd, w3_bd, b3_bd)

    return out2.reshape(n, c, h, w)


def coord_att_ref(x, p):
    """Pure-JAX reference matching the PyTorch forward (BN in eval mode)."""
    n, c, h, w = x.shape
    x_h = jnp.mean(x, axis=3, keepdims=True)                          # (n,c,h,1)
    x_w = jnp.mean(x, axis=2, keepdims=True)                          # (n,c,1,w)
    x_w = jnp.transpose(x_w, (0, 1, 3, 2))                            # (n,c,w,1)
    y = jnp.concatenate([x_h, x_w], axis=2)                           # (n,c,h+w,1)
    y = jnp.einsum('oc,nclk->nolk', p["w1"], y) + p["b1"].reshape(1, -1, 1, 1)
    y = ((y - p["mean"].reshape(1, -1, 1, 1))
         / jnp.sqrt(p["var"].reshape(1, -1, 1, 1) + BN_EPS)
         * p["gamma"].reshape(1, -1, 1, 1)
         + p["beta"].reshape(1, -1, 1, 1))
    y = y * jnp.clip(y + 3.0, 0.0, 6.0) / 6.0
    y_h, y_w = y[:, :, :h], y[:, :, h:]
    y_w = jnp.transpose(y_w, (0, 1, 3, 2))                            # (n,mip,1,w)
    a_h = jax.nn.sigmoid(
        jnp.einsum('om,nmhk->nohk', p["w2"], y_h) + p["b2"].reshape(1, -1, 1, 1))
    a_w = jax.nn.sigmoid(
        jnp.einsum('om,nmhk->nohk', p["w3"], y_w) + p["b3"].reshape(1, -1, 1, 1))
    return x * a_w * a_h


def make_params(inp, oup, groups=32, key=None):
    # Deterministic in-script initialization (synthetic, not a checkpoint).
    assert inp == oup, "CoordAtt's final product requires oup == inp"
    mip = max(8, inp // groups)
    if key is None:
        key = jax.random.PRNGKey(0)
    ks = jax.random.split(key, 10)
    return {
        "w1": jax.random.normal(ks[0], (mip, inp), jnp.float32) * 0.3,
        "b1": jax.random.normal(ks[1], (mip, 1), jnp.float32) * 0.1,
        # BatchNorm (eval mode) running statistics + affine params.
        "gamma": 1.0 + 0.1 * jax.random.normal(ks[2], (mip, 1), jnp.float32),
        "beta": 0.1 * jax.random.normal(ks[3], (mip, 1), jnp.float32),
        "mean": 0.1 * jax.random.normal(ks[4], (mip, 1), jnp.float32),
        "var": 1.0 + 0.1 * jax.random.uniform(ks[5], (mip, 1), jnp.float32),
        "w2": jax.random.normal(ks[6], (oup, mip), jnp.float32) * 0.3,
        "b2": 0.1 * jax.random.normal(ks[7], (oup, 1), jnp.float32),
        "w3": jax.random.normal(ks[8], (oup, mip), jnp.float32) * 0.3,
        "b3": 0.1 * jax.random.normal(ks[9], (oup, 1), jnp.float32),
    }


if __name__ == "__main__":
    N, C, H, W = 2, 32, 16, 16        # mip = max(8, 32 // 32) = 8
    key = jax.random.PRNGKey(0)
    kx, kp = jax.random.split(key)
    x = jax.random.normal(kx, (N, C, H, W), jnp.float32)
    params = make_params(C, C, groups=32, key=kp)

    out = jax.block_until_ready(coord_att(x, params))
    ref = coord_att_ref(x, params)

    assert out.shape == (N, C, H, W)
    max_diff = float(jnp.max(jnp.abs(out - ref)))
    assert jnp.allclose(out, ref, rtol=1e-5, atol=1e-5), f"max diff {max_diff}"
    print("KERNEL_OK")
</pallas_src>

<mosaic_0001>
module attributes {stable_mosaic.version = 11 : i64} {
  func.func @coordatt_kernel(%arg0: i32, %arg1: memref<32x256xf32, #tpu.memory_space<vmem>>, %arg2: memref<256x32xf32, #tpu.memory_space<vmem>>, %arg3: memref<1x32xf32, #tpu.memory_space<vmem>>, %arg4: memref<16x256xf32, #tpu.memory_space<vmem>>, %arg5: memref<16x256xf32, #tpu.memory_space<vmem>>, %arg6: memref<8x32xf32, #tpu.memory_space<vmem>>, %arg7: memref<8x1xf32, #tpu.memory_space<vmem>>, %arg8: memref<32x8xf32, #tpu.memory_space<vmem>>, %arg9: memref<32x1xf32, #tpu.memory_space<vmem>>, %arg10: memref<32x8xf32, #tpu.memory_space<vmem>>, %arg11: memref<32x1xf32, #tpu.memory_space<vmem>>, %arg12: memref<32x256xf32, #tpu.memory_space<vmem>>) attributes {dimension_semantics = [#tpu.dimension_semantics<parallel>], iteration_bounds = array<i64: 2>, scalar_prefetch = 0 : i64, scratch_operands = 0 : i64, tpu.core_type = #tpu.core_type<tc>, window_params = [{transform_indices = @transform_0, window_bounds = array<i64: 32, 256>}, {pipeline_mode = #tpu.pipeline_mode<synchronous>, transform_indices = @transform_1, window_bounds = array<i64: 256, 32>}, {pipeline_mode = #tpu.pipeline_mode<synchronous>, transform_indices = @transform_2, window_bounds = array<i64: 1, 32>}, {pipeline_mode = #tpu.pipeline_mode<synchronous>, transform_indices = @transform_3, window_bounds = array<i64: 16, 256>}, {pipeline_mode = #tpu.pipeline_mode<synchronous>, transform_indices = @transform_4, window_bounds = array<i64: 16, 256>}, {pipeline_mode = #tpu.pipeline_mode<synchronous>, transform_indices = @transform_5, window_bounds = array<i64: 8, 32>}, {pipeline_mode = #tpu.pipeline_mode<synchronous>, transform_indices = @transform_6, window_bounds = array<i64: 8, 1>}, {pipeline_mode = #tpu.pipeline_mode<synchronous>, transform_indices = @transform_7, window_bounds = array<i64: 32, 8>}, {pipeline_mode = #tpu.pipeline_mode<synchronous>, transform_indices = @transform_8, window_bounds = array<i64: 32, 1>}, {pipeline_mode = #tpu.pipeline_mode<synchronous>, transform_indices = @transform_9, window_bounds = array<i64: 32, 8>}, {pipeline_mode = #tpu.pipeline_mode<synchronous>, transform_indices = @transform_10, window_bounds = array<i64: 32, 1>}, {transform_indices = @transform_11, window_bounds = array<i64: 32, 256>}]} {
    %c0 = arith.constant 0 : index
    %c0_0 = arith.constant 0 : index
    %0 = vector.load %arg1[%c0, %c0_0] : memref<32x256xf32, #tpu.memory_space<vmem>>, vector<32x256xf32>
    %c0_1 = arith.constant 0 : index
    %c0_2 = arith.constant 0 : index
    %1 = vector.load %arg2[%c0_1, %c0_2] : memref<256x32xf32, #tpu.memory_space<vmem>>, vector<256x32xf32>
    %cst = arith.constant dense<0.000000e+00> : vector<32x32xf32>
    %2 = tpu.matmul %0, %1, %cst {dimension_numbers = #tpu.dot_dimension_numbers<[1], [0], [0], [1], [0, 0, 1, 1], [], []>} : vector<32x256xf32>, vector<256x32xf32>, vector<32x32xf32> -> vector<32x32xf32>
    %c0_3 = arith.constant 0 : index
    %c0_4 = arith.constant 0 : index
    %3 = vector.load %arg3[%c0_3, %c0_4] : memref<1x32xf32, #tpu.memory_space<vmem>>, vector<1x32xf32>
    %4 = vector.broadcast %3 : vector<1x32xf32> to vector<32x32xf32>
    %5 = arith.mulf %2, %4 : vector<32x32xf32>
    %c0_5 = arith.constant 0 : index
    %c0_6 = arith.constant 0 : index
    %6 = vector.load %arg6[%c0_5, %c0_6] : memref<8x32xf32, #tpu.memory_space<vmem>>, vector<8x32xf32>
    %cst_7 = arith.constant dense<0.000000e+00> : vector<8x32xf32>
    %7 = tpu.matmul %6, %5, %cst_7 {dimension_numbers = #tpu.dot_dimension_numbers<[1], [0], [0], [1], [0, 0, 1, 1], [], []>} : vector<8x32xf32>, vector<32x32xf32>, vector<8x32xf32> -> vector<8x32xf32>
    %c0_8 = arith.constant 0 : index
    %c0_9 = arith.constant 0 : index
    %8 = vector.load %arg7[%c0_8, %c0_9] : memref<8x1xf32, #tpu.memory_space<vmem>>, vector<8x1xf32>
    %9 = vector.broadcast %8 : vector<8x1xf32> to vector<8x32xf32>
    %10 = arith.addf %7, %9 : vector<8x32xf32>
    %cst_10 = arith.constant 3.000000e+00 : f32
    %11 = vector.broadcast %cst_10 : f32 to vector<8x32xf32>
    %12 = arith.addf %10, %11 : vector<8x32xf32>
    %cst_11 = arith.constant 0.000000e+00 : f32
    %cst_12 = arith.constant 6.000000e+00 : f32
    %13 = vector.broadcast %cst_11 : f32 to vector<8x32xf32>
    %14 = arith.maximumf %13, %12 : vector<8x32xf32>
    %15 = vector.broadcast %cst_12 : f32 to vector<8x32xf32>
    %16 = arith.minimumf %15, %14 : vector<8x32xf32>
    %17 = arith.mulf %10, %16 : vector<8x32xf32>
    %cst_13 = arith.constant 0.166666672 : f32
    %18 = vector.broadcast %cst_13 : f32 to vector<8x32xf32>
    %19 = arith.mulf %17, %18 : vector<8x32xf32>
    %c0_14 = arith.constant 0 : index
    %c0_15 = arith.constant 0 : index
    %20 = vector.load %arg8[%c0_14, %c0_15] : memref<32x8xf32, #tpu.memory_space<vmem>>, vector<32x8xf32>
    %21 = vector.extract_strided_slice %19 {offsets = [0, 0], sizes = [8, 16], strides = [1, 1]} : vector<8x32xf32> to vector<8x16xf32>
    %cst_16 = arith.constant dense<0.000000e+00> : vector<32x16xf32>
    %22 = tpu.matmul %20, %21, %cst_16 {dimension_numbers = #tpu.dot_dimension_numbers<[1], [0], [0], [1], [0, 0, 1, 1], [], []>} : vector<32x8xf32>, vector<8x16xf32>, vector<32x16xf32> -> vector<32x16xf32>
    %c0_17 = arith.constant 0 : index
    %c0_18 = arith.constant 0 : index
    %23 = vector.load %arg9[%c0_17, %c0_18] : memref<32x1xf32, #tpu.memory_space<vmem>>, vector<32x1xf32>
    %24 = vector.broadcast %23 : vector<32x1xf32> to vector<32x16xf32>
    %25 = arith.addf %22, %24 : vector<32x16xf32>
    %26 = arith.negf %25 : vector<32x16xf32>
    %27 = math.exp %26 : vector<32x16xf32>
    %cst_19 = arith.constant 1.000000e+00 : f32
    %28 = vector.broadcast %cst_19 : f32 to vector<32x16xf32>
    %29 = arith.addf %28, %27 : vector<32x16xf32>
    %30 = arith.divf %28, %29 : vector<32x16xf32>
    %c0_20 = arith.constant 0 : index
    %c0_21 = arith.constant 0 : index
    %31 = vector.load %arg10[%c0_20, %c0_21] : memref<32x8xf32, #tpu.memory_space<vmem>>, vector<32x8xf32>
    %32 = vector.extract_strided_slice %19 {offsets = [0, 16], sizes = [8, 16], strides = [1, 1]} : vector<8x32xf32> to vector<8x16xf32>
    %cst_22 = arith.constant dense<0.000000e+00> : vector<32x16xf32>
    %33 = tpu.matmul %31, %32, %cst_22 {dimension_numbers = #tpu.dot_dimension_numbers<[1], [0], [0], [1], [0, 0, 1, 1], [], []>} : vector<32x8xf32>, vector<8x16xf32>, vector<32x16xf32> -> vector<32x16xf32>
    %c0_23 = arith.constant 0 : index
    %c0_24 = arith.constant 0 : index
    %34 = vector.load %arg11[%c0_23, %c0_24] : memref<32x1xf32, #tpu.memory_space<vmem>>, vector<32x1xf32>
    %35 = vector.broadcast %34 : vector<32x1xf32> to vector<32x16xf32>
    %36 = arith.addf %33, %35 : vector<32x16xf32>
    %37 = arith.negf %36 : vector<32x16xf32>
    %38 = math.exp %37 : vector<32x16xf32>
    %cst_25 = arith.constant 1.000000e+00 : f32
    %39 = vector.broadcast %cst_25 : f32 to vector<32x16xf32>
    %40 = arith.addf %39, %38 : vector<32x16xf32>
    %41 = arith.divf %39, %40 : vector<32x16xf32>
    %c0_26 = arith.constant 0 : index
    %c0_27 = arith.constant 0 : index
    %42 = vector.load %arg4[%c0_26, %c0_27] : memref<16x256xf32, #tpu.memory_space<vmem>>, vector<16x256xf32>
    %cst_28 = arith.constant dense<0.000000e+00> : vector<32x256xf32>
    %43 = tpu.matmul %30, %42, %cst_28 {dimension_numbers = #tpu.dot_dimension_numbers<[1], [0], [0], [1], [0, 0, 1, 1], [], []>} : vector<32x16xf32>, vector<16x256xf32>, vector<32x256xf32> -> vector<32x256xf32>
    %c0_29 = arith.constant 0 : index
    %c0_30 = arith.constant 0 : index
    %44 = vector.load %arg5[%c0_29, %c0_30] : memref<16x256xf32, #tpu.memory_space<vmem>>, vector<16x256xf32>
    %cst_31 = arith.constant dense<0.000000e+00> : vector<32x256xf32>
    %45 = tpu.matmul %41, %44, %cst_31 {dimension_numbers = #tpu.dot_dimension_numbers<[1], [0], [0], [1], [0, 0, 1, 1], [], []>} : vector<32x16xf32>, vector<16x256xf32>, vector<32x256xf32> -> vector<32x256xf32>
    %46 = arith.mulf %0, %45 : vector<32x256xf32>
    %47 = arith.mulf %46, %43 : vector<32x256xf32>
    %c0_32 = arith.constant 0 : index
    %c0_33 = arith.constant 0 : index
    %48 = vector.load %arg12[%c0_32, %c0_33] : memref<32x256xf32, #tpu.memory_space<vmem>>, vector<32x256xf32>
    tpu.vector_store %arg12[%c0_32, %c0_33], %47 {strides = array<i32>} : memref<32x256xf32, #tpu.memory_space<vmem>>, vector<32x256xf32>,
    return
  }
  func.func @transform_0(%arg0: i32) -> (i32, i32) {
    %c0_i32 = arith.constant 0 : i32
    %c0_i32_0 = arith.constant 0 : i32
    return %arg0, %c0_i32 : i32, i32
  }
  func.func @transform_1(%arg0: i32) -> (i32, i32) {
    %c0_i32 = arith.constant 0 : i32
    %c0_i32_0 = arith.constant 0 : i32
    %c0_i32_1 = arith.constant 0 : i32
    return %c0_i32, %c0_i32_0 : i32, i32
  }
  func.func @transform_2(%arg0: i32) -> (i32, i32) {
    %c0_i32 = arith.constant 0 : i32
    %c0_i32_0 = arith.constant 0 : i32
    %c0_i32_1 = arith.constant 0 : i32
    return %c0_i32, %c0_i32_0 : i32, i32
  }
  func.func @transform_3(%arg0: i32) -> (i32, i32) {
    %c0_i32 = arith.constant 0 : i32
    %c0_i32_0 = arith.constant 0 : i32
    %c0_i32_1 = arith.constant 0 : i32
    return %c0_i32, %c0_i32_0 : i32, i32
  }
  func.func @transform_4(%arg0: i32) -> (i32, i32) {
    %c0_i32 = arith.constant 0 : i32
    %c0_i32_0 = arith.constant 0 : i32
    %c0_i32_1 = arith.constant 0 : i32
    return %c0_i32, %c0_i32_0 : i32, i32
  }
  func.func @transform_5(%arg0: i32) -> (i32, i32) {
    %c0_i32 = arith.constant 0 : i32
    %c0_i32_0 = arith.constant 0 : i32
    %c0_i32_1 = arith.constant 0 : i32
    return %c0_i32, %c0_i32_0 : i32, i32
  }
  func.func @transform_6(%arg0: i32) -> (i32, i32) {
    %c0_i32 = arith.constant 0 : i32
    %c0_i32_0 = arith.constant 0 : i32
    %c0_i32_1 = arith.constant 0 : i32
    return %c0_i32, %c0_i32_0 : i32, i32
  }
  func.func @transform_7(%arg0: i32) -> (i32, i32) {
    %c0_i32 = arith.constant 0 : i32
    %c0_i32_0 = arith.constant 0 : i32
    %c0_i32_1 = arith.constant 0 : i32
    return %c0_i32, %c0_i32_0 : i32, i32
  }
  func.func @transform_8(%arg0: i32) -> (i32, i32) {
    %c0_i32 = arith.constant 0 : i32
    %c0_i32_0 = arith.constant 0 : i32
    %c0_i32_1 = arith.constant 0 : i32
    return %c0_i32, %c0_i32_0 : i32, i32
  }
  func.func @transform_9(%arg0: i32) -> (i32, i32) {
    %c0_i32 = arith.constant 0 : i32
    %c0_i32_0 = arith.constant 0 : i32
    %c0_i32_1 = arith.constant 0 : i32
    return %c0_i32, %c0_i32_0 : i32, i32
  }
  func.func @transform_10(%arg0: i32) -> (i32, i32) {
    %c0_i32 = arith.constant 0 : i32
    %c0_i32_0 = arith.constant 0 : i32
    %c0_i32_1 = arith.constant 0 : i32
    return %c0_i32, %c0_i32_0 : i32, i32
  }
  func.func @transform_11(%arg0: i32) -> (i32, i32) {
    %c0_i32 = arith.constant 0 : i32
    %c0_i32_0 = arith.constant 0 : i32
    return %arg0, %c0_i32 : i32, i32
  }
}

</mosaic_0001>

<llo_original>
// kernel: tpu_custom_call.1
$region0: #{tpu_custom_call.1}
  #allocation0 [shape = 'u32[]', space=smem, size = 0x4, offset = 0x4, fixed_abs, tag = 'smem constant byte address 0x4 - core index']
  #allocation1 [shape = 'u32[144,128]{1,0:T(1,128)}', space=vmem, size = 0x12000, scoped, tag = 'internal scratch']
  %s0 = inlined_call_operand.vmem [shape: f32[64,256], index: 0, kind: input, shape index: {}]
  %s1 = inlined_call_operand.vmem [shape: f32[256,32], index: 1, kind: input, shape index: {}]
  %s2 = inlined_call_operand.vmem [shape: f32[1,32], index: 2, kind: input, shape index: {}]
  %s3 = inlined_call_operand.vmem [shape: f32[16,256], index: 3, kind: input, shape index: {}]
  %s4 = inlined_call_operand.vmem [shape: f32[16,256], index: 4, kind: input, shape index: {}]
  %s5 = inlined_call_operand.vmem [shape: f32[8,32], index: 5, kind: input, shape index: {}]
  %s6 = inlined_call_operand.vmem [shape: f32[8,1], index: 6, kind: input, shape index: {}]
  %s7 = inlined_call_operand.vmem [shape: f32[32,8], index: 7, kind: input, shape index: {}]
  %s8 = inlined_call_operand.vmem [shape: f32[32,1], index: 8, kind: input, shape index: {}]
  %s9 = inlined_call_operand.vmem [shape: f32[32,8], index: 9, kind: input, shape index: {}]
  %s10 = inlined_call_operand.vmem [shape: f32[32,1], index: 10, kind: input, shape index: {}]
  %s11 = inlined_call_operand.hbm [shape: f32[64,256], index: 11, kind: output, shape index: {}]
  %s12 = sld [smem:[#allocation0]]
  $region77: #{tpu_custom_call.1} parent=0
    _
  %s14 = ssub.s32 1, %s12
  %s15 = scalar_select 0, %s14, %s12
  $region1: #{tpu_custom_call.1} parent=0
    #allocation2 [shape = 'u8[65536]{0}', space=vmem, size = 0x10000, scoped, tag = 'output window, operand 0']
    #allocation3 [shape = 's32[2]{0}', space=sflag, size = 0x8, scoped, tag = 'scoped memory for tpu_custom_call.1']
    %16 = vsyncpa [#allocation3], 0
    %s17 = scalar_lea.sflag [#allocation3], 1
    %18 = vsyncpa %s17, 0
    loop: start=0, step=1, limit=4
    $region2: #{tpu_custom_call.1} parent=1 // loop_pre_header
      _
    $region3: #{tpu_custom_call.1} parent=1 // loop_header
      %s20 = sphi 0, %s24
      %p21 = scmp.ge.s32.totalorder %s20, 4
      %s30 = sphi 0, %s32
      %s33 = sphi 0, %s30
      %s34 = sphi 0, %s33
      %s50 = sphi 0, %s34
      %s54 = sphi 0, %s54
      %s56 = sphi 0, %s54
      %s57 = sphi 0, %s56
      %s71 = sphi 0, %s57
      %s75 = sphi 0, %s75
      %s77 = sphi 0, %s75
      %s78 = sphi 0, %s77
      %s92 = sphi 0, %s78
      %s96 = sphi 0, %s96
      %s98 = sphi 0, %s96
      %s99 = sphi 0, %s98
      %s113 = sphi 0, %s99
      %s117 = sphi 0, %s117
      %s119 = sphi 0, %s117
      %s120 = sphi 0, %s119
      %s134 = sphi 0, %s120
      %s138 = sphi 0, %s138
      %s140 = sphi 0, %s138
      %s141 = sphi 0, %s140
      %s155 = sphi 0, %s141
      %s159 = sphi 0, %s159
      %s161 = sphi 0, %s159
      %s162 = sphi 0, %s161
      %s176 = sphi 0, %s162
      %s180 = sphi 0, %s180
      %s182 = sphi 0, %s180
      %s183 = sphi 0, %s182
      %s197 = sphi 0, %s183
      %s201 = sphi 0, %s201
      %s203 = sphi 0, %s201
      %s204 = sphi 0, %s203
      %s218 = sphi 0, %s204
      %s222 = sphi 0, %s222
      %s224 = sphi 0, %s222
      %s225 = sphi 0, %s224
      %s239 = sphi 0, %s225
      %s243 = sphi 0, %s243
      %s245 = sphi 0, %s243
      %s246 = sphi 0, %s245
      %s260 = sphi 0, %s246
      %s266 = sphi 0, %s268
      %s269 = sphi 0, %s266
      %s270 = sphi 0, %s269
      %s286 = sphi 0, %s270
    $region4: #{tpu_custom_call.1} parent=1 // loop_header_branch
      %23 = sbr.rel (%p21) target = $region8
    $region5: #{tpu_custom_call.1} parent=1 // loop_body
      %s25 = ssub.s32 %s20, 1
      %s26 = ssub.s32 %s20, 2
      %s27 = sadd.s32 %s20, 1
      %s28 = ssub.s32 %s20, %s27
      %p29 = scmp.eq.s32.totalorder %s28, 0
      %s31 = sadd.s32 %s30, 1
      %s32 = scalar_select %p29, %s30, %s31
      %p35 = pneg %p29
      %p36 = scmp.eq.s32.totalorder %s20, 1
      %p37 = por %p35, %p36
      %p38 = scmp.ne.s32.totalorder %s30, %s33
      %p39 = scmp.eq.s32.totalorder %s20, 0
      %p40 = por %p38, %p39
      %p41 = scmp.ne.s32.totalorder %s30, %s33
      %p42 = scmp.eq.s32.totalorder %s25, 1
      %p43 = por %p41, %p42
      %p44 = scmp.ne.s32.totalorder %s33, %s34
      %p45 = scmp.eq.s32.totalorder %s25, 0
      %p46 = por %p44, %p45
      %p47 = scmp.ne.s32.totalorder %s33, %s34
      %p48 = scmp.eq.s32.totalorder %s26, 1
      %p49 = por %p47, %p48
      %p51 = scmp.ne.s32.totalorder %s34, %s50
      %p52 = scmp.eq.s32.totalorder %s26, 0
      %p53 = por %p51, %p52
      %s55 = sadd.s32 %s54, 1
      %p58 = scmp.eq.s32.totalorder %s20, 1
      %p59 = scmp.ne.s32.totalorder %s54, %s56
      %p60 = scmp.eq.s32.totalorder %s20, 0
      %p61 = por %p59, %p60
      %p62 = scmp.ne.s32.totalorder %s54, %s56
      %p63 = scmp.eq.s32.totalorder %s25, 1
      %p64 = por %p62, %p63
      %p65 = scmp.ne.s32.totalorder %s56, %s57
      %p66 = scmp.eq.s32.totalorder %s25, 0
      %p67 = por %p65, %p66
      %p68 = scmp.ne.s32.totalorder %s56, %s57
      %p69 = scmp.eq.s32.totalorder %s26, 1
      %p70 = por %p68, %p69
      %p72 = scmp.ne.s32.totalorder %s57, %s71
      %p73 = scmp.eq.s32.totalorder %s26, 0
      %p74 = por %p72, %p73
      %s76 = sadd.s32 %s75, 1
      %p79 = scmp.eq.s32.totalorder %s20, 1
      %p80 = scmp.ne.s32.totalorder %s75, %s77
      %p81 = scmp.eq.s32.totalorder %s20, 0
      %p82 = por %p80, %p81
      %p83 = scmp.ne.s32.totalorder %s75, %s77
      %p84 = scmp.eq.s32.totalorder %s25, 1
      %p85 = por %p83, %p84
      %p86 = scmp.ne.s32.totalorder %s77, %s78
      %p87 = scmp.eq.s32.totalorder %s25, 0
      %p88 = por %p86, %p87
      %p89 = scmp.ne.s32.totalorder %s77, %s78
      %p90 = scmp.eq.s32.totalorder %s26, 1
      %p91 = por %p89, %p90
      %p93 = scmp.ne.s32.totalorder %s78, %s92
      %p94 = scmp.eq.s32.totalorder %s26, 0
      %p95 = por %p93, %p94
      %s97 = sadd.s32 %s96, 1
      %p100 = scmp.eq.s32.totalorder %s20, 1
      %p101 = scmp.ne.s32.totalorder %s96, %s98
      %p102 = scmp.eq.s32.totalorder %s20, 0
      %p103 = por %p101, %p102
      %p104 = scmp.ne.s32.totalorder %s96, %s98
      %p105 = scmp.eq.s32.totalorder %s25, 1
      %p106 = por %p104, %p105
      %p107 = scmp.ne.s32.totalorder %s98, %s99
      %p108 = scmp.eq.s32.totalorder %s25, 0
      %p109 = por %p107, %p108
      %p110 = scmp.ne.s32.totalorder %s98, %s99
      %p111 = scmp.eq.s32.totalorder %s26, 1
      %p112 = por %p110, %p111
      %p114 = scmp.ne.s32.totalorder %s99, %s113
      %p115 = scmp.eq.s32.totalorder %s26, 0
      %p116 = por %p114, %p115
      %s118 = sadd.s32 %s117, 1
      %p121 = scmp.eq.s32.totalorder %s20, 1
      %p122 = scmp.ne.s32.totalorder %s117, %s119
      %p123 = scmp.eq.s32.totalorder %s20, 0
      %p124 = por %p122, %p123
      %p125 = scmp.ne.s32.totalorder %s117, %s119
      %p126 = scmp.eq.s32.totalorder %s25, 1
      %p127 = por %p125, %p126
      %p128 = scmp.ne.s32.totalorder %s119, %s120
      %p129 = scmp.eq.s32.totalorder %s25, 0
      %p130 = por %p128, %p129
      %p131 = scmp.ne.s32.totalorder %s119, %s120
      %p132 = scmp.eq.s32.totalorder %s26, 1
      %p133 = por %p131, %p132
      %p135 = scmp.ne.s32.totalorder %s120, %s134
      %p136 = scmp.eq.s32.totalorder %s26, 0
      %p137 = por %p135, %p136
      %s139 = sadd.s32 %s138, 1
      %p142 = scmp.eq.s32.totalorder %s20, 1
      %p143 = scmp.ne.s32.totalorder %s138, %s140
      %p144 = scmp.eq.s32.totalorder %s20, 0
      %p145 = por %p143, %p144
      %p146 = scmp.ne.s32.totalorder %s138, %s140
      %p147 = scmp.eq.s32.totalorder %s25, 1
      %p148 = por %p146, %p147
      %p149 = scmp.ne.s32.totalorder %s140, %s141
      %p150 = scmp.eq.s32.totalorder %s25, 0
      %p151 = por %p149, %p150
      %p152 = scmp.ne.s32.totalorder %s140, %s141
      %p153 = scmp.eq.s32.totalorder %s26, 1
      %p154 = por %p152, %p153
      %p156 = scmp.ne.s32.totalorder %s141, %s155
      %p157 = scmp.eq.s32.totalorder %s26, 0
      %p158 = por %p156, %p157
      %s160 = sadd.s32 %s159, 1
      %p163 = scmp.eq.s32.totalorder %s20, 1
      %p164 = scmp.ne.s32.totalorder %s159, %s161
      %p165 = scmp.eq.s32.totalorder %s20, 0
      %p166 = por %p164, %p165
      %p167 = scmp.ne.s32.totalorder %s159, %s161
      %p168 = scmp.eq.s32.totalorder %s25, 1
      %p169 = por %p167, %p168
      %p170 = scmp.ne.s32.totalorder %s161, %s162
      %p171 = scmp.eq.s32.totalorder %s25, 0
      %p172 = por %p170, %p171
      %p173 = scmp.ne.s32.totalorder %s161, %s162
      %p174 = scmp.eq.s32.totalorder %s26, 1
      %p175 = por %p173, %p174
      %p177 = scmp.ne.s32.totalorder %s162, %s176
      %p178 = scmp.eq.s32.totalorder %s26, 0
      %p179 = por %p177, %p178
      %s181 = sadd.s32 %s180, 1
      %p184 = scmp.eq.s32.totalorder %s20, 1
      %p185 = scmp.ne.s32.totalorder %s180, %s182
      %p186 = scmp.eq.s32.totalorder %s20, 0
      %p187 = por %p185, %p186
      %p188 = scmp.ne.s32.totalorder %s180, %s182
      %p189 = scmp.eq.s32.totalorder %s25, 1
      %p190 = por %p188, %p189
      %p191 = scmp.ne.s32.totalorder %s182, %s183
      %p192 = scmp.eq.s32.totalorder %s25, 0
      %p193 = por %p191, %p192
      %p194 = scmp.ne.s32.totalorder %s182, %s183
      %p195 = scmp.eq.s32.totalorder %s26, 1
      %p196 = por %p194, %p195
      %p198 = scmp.ne.s32.totalorder %s183, %s197
      %p199 = scmp.eq.s32.totalorder %s26, 0
      %p200 = por %p198, %p199
      %s202 = sadd.s32 %s201, 1
      %p205 = scmp.eq.s32.totalorder %s20, 1
      %p206 = scmp.ne.s32.totalorder %s201, %s203
      %p207 = scmp.eq.s32.totalorder %s20, 0
      %p208 = por %p206, %p207
      %p209 = scmp.ne.s32.totalorder %s201, %s203
      %p210 = scmp.eq.s32.totalorder %s25, 1
      %p211 = por %p209, %p210
      %p212 = scmp.ne.s32.totalorder %s203, %s204
      %p213 = scmp.eq.s32.totalorder %s25, 0
      %p214 = por %p212, %p213
      %p215 = scmp.ne.s32.totalorder %s203, %s204
      %p216 = scmp.eq.s32.totalorder %s26, 1
      %p217 = por %p215, %p216
      %p219 = scmp.ne.s32.totalorder %s204, %s218
      %p220 = scmp.eq.s32.totalorder %s26, 0
      %p221 = por %p219, %p220
      %s223 = sadd.s32 %s222, 1
      %p226 = scmp.eq.s32.totalorder %s20, 1
      %p227 = scmp.ne.s32.totalorder %s222, %s224
      %p228 = scmp.eq.s32.totalorder %s20, 0
      %p229 = por %p227, %p228
      %p230 = scmp.ne.s32.totalorder %s222, %s224
      %p231 = scmp.eq.s32.totalorder %s25, 1
      %p232 = por %p230, %p231
      %p233 = scmp.ne.s32.totalorder %s224, %s225
      %p234 = scmp.eq.s32.totalorder %s25, 0
      %p235 = por %p233, %p234
      %p236 = scmp.ne.s32.totalorder %s224, %s225
      %p237 = scmp.eq.s32.totalorder %s26, 1
      %p238 = por %p236, %p237
      %p240 = scmp.ne.s32.totalorder %s225, %s239
      %p241 = scmp.eq.s32.totalorder %s26, 0
      %p242 = por %p240, %p241
      %s244 = sadd.s32 %s243, 1
      %p247 = scmp.eq.s32.totalorder %s20, 1
      %p248 = scmp.ne.s32.totalorder %s243, %s245
      %p249 = scmp.eq.s32.totalorder %s20, 0
      %p250 = por %p248, %p249
      %p251 = scmp.ne.s32.totalorder %s243, %s245
      %p252 = scmp.eq.s32.totalorder %s25, 1
      %p253 = por %p251, %p252
      %p254 = scmp.ne.s32.totalorder %s245, %s246
      %p255 = scmp.eq.s32.totalorder %s25, 0
      %p256 = por %p254, %p255
      %p257 = scmp.ne.s32.totalorder %s245, %s246
      %p258 = scmp.eq.s32.totalorder %s26, 1
      %p259 = por %p257, %p258
      %p261 = scmp.ne.s32.totalorder %s246, %s260
      %p262 = scmp.eq.s32.totalorder %s26, 0
      %p263 = por %p261, %p262
      %s264 = ssub.s32 %s20, %s27
      %p265 = scmp.eq.s32.totalorder %s264, 0
      %s267 = sadd.s32 %s266, 1
      %s268 = scalar_select %p265, %s266, %s267
      %p271 = pneg %p265
      %p272 = scmp.eq.s32.totalorder %s20, 1
      %p273 = por %p271, %p272
      %p274 = scmp.ne.s32.totalorder %s266, %s269
      %p275 = scmp.eq.s32.totalorder %s20, 0
      %p276 = por %p274, %p275
      %p277 = scmp.ne.s32.totalorder %s266, %s269
      %p278 = scmp.eq.s32.totalorder %s25, 1
      %p279 = por %p277, %p278
      %p280 = scmp.ne.s32.totalorder %s269, %s270
      %p281 = scmp.eq.s32.totalorder %s25, 0
      %p282 = por %p280, %p281
      %p283 = scmp.ne.s32.totalorder %s269, %s270
      %p284 = scmp.eq.s32.totalorder %s26, 1
      %p285 = por %p283, %p284
      %p287 = scmp.ne.s32.totalorder %s270, %s286
      %p288 = scmp.eq.s32.totalorder %s26, 0
      %p289 = por %p287, %p288
      %p290 = scmp.le.s32.totalorder 1, %s20
      %p291 = scmp.lt.s32.totalorder %s20, 3
      %p292 = pnand %p290, %p291
      %p293 = pneg %p292
      // Predicated region
      $region9: #{tpu_custom_call.1} parent=5 // pred_check
        _
      $region10: #{tpu_custom_call.1} parent=5 // pred_check_branch
        %295 = sbr.rel (%p292) target = $region12
      $region11: #{tpu_custom_call.1} parent=5 // pred_region
        %s296 = ssub.s32 %s20, 1
        // Predicated region
        $region13: #{tpu_custom_call.1} parent=11 // pred_check
          %p297 = pneg %p67
        $region14: #{tpu_custom_call.1} parent=11 // pred_check_branch
          %299 = sbr.rel (%p297) target = $region16
        $region15: #{tpu_custom_call.1} parent=11 // pred_region
          _
        $region16: #{tpu_custom_call.1} parent=11 // pred_fallthru
          _
        // Predicated region
        $region17: #{tpu_custom_call.1} parent=11 // pred_check
          %p300 = pneg %p88
        $region18: #{tpu_custom_call.1} parent=11 // pred_check_branch
          %302 = sbr.rel (%p300) target = $region20
        $region19: #{tpu_custom_call.1} parent=11 // pred_region
          _
        $region20: #{tpu_custom_call.1} parent=11 // pred_fallthru
          _
        // Predicated region
        $region21: #{tpu_custom_call.1} parent=11 // pred_check
          %p303 = pneg %p109
        $region22: #{tpu_custom_call.1} parent=11 // pred_check_branch
          %305 = sbr.rel (%p303) target = $region24
        $region23: #{tpu_custom_call.1} parent=11 // pred_region
          _
        $region24: #{tpu_custom_call.1} parent=11 // pred_fallthru
          _
        // Predicated region
        $region25: #{tpu_custom_call.1} parent=11 // pred_check
          %p306 = pneg %p130
        $region26: #{tpu_custom_call.1} parent=11 // pred_check_branch
          %308 = sbr.rel (%p306) target = $region28
        $region27: #{tpu_custom_call.1} parent=11 // pred_region
          _
        $region28: #{tpu_custom_call.1} parent=11 // pred_fallthru
          _
        // Predicated region
        $region29: #{tpu_custom_call.1} parent=11 // pred_check
          %p309 = pneg %p151
        $region30: #{tpu_custom_call.1} parent=11 // pred_check_branch
          %311 = sbr.rel (%p309) target = $region32
        $region31: #{tpu_custom_call.1} parent=11 // pred_region
          _
        $region32: #{tpu_custom_call.1} parent=11 // pred_fallthru
          _
        // Predicated region
        $region33: #{tpu_custom_call.1} parent=11 // pred_check
          %p312 = pneg %p172
        $region34: #{tpu_custom_call.1} parent=11 // pred_check_branch
          %314 = sbr.rel (%p312) target = $region36
        $region35: #{tpu_custom_call.1} parent=11 // pred_region
          _
        $region36: #{tpu_custom_call.1} parent=11 // pred_fallthru
          _
        // Predicated region
        $region37: #{tpu_custom_call.1} parent=11 // pred_check
          %p315 = pneg %p193
        $region38: #{tpu_custom_call.1} parent=11 // pred_check_branch
          %317 = sbr.rel (%p315) target = $region40
        $region39: #{tpu_custom_call.1} parent=11 // pred_region
          _
        $region40: #{tpu_custom_call.1} parent=11 // pred_fallthru
          _
        // Predicated region
        $region41: #{tpu_custom_call.1} parent=11 // pred_check
          %p318 = pneg %p214
        $region42: #{tpu_custom_call.1} parent=11 // pred_check_branch
          %320 = sbr.rel (%p318) target = $region44
        $region43: #{tpu_custom_call.1} parent=11 // pred_region
          _
        $region44: #{tpu_custom_call.1} parent=11 // pred_fallthru
          _
        // Predicated region
        $region45: #{tpu_custom_call.1} parent=11 // pred_check
          %p321 = pneg %p235
        $region46: #{tpu_custom_call.1} parent=11 // pred_check_branch
          %323 = sbr.rel (%p321) target = $region48
        $region47: #{tpu_custom_call.1} parent=11 // pred_region
          _
        $region48: #{tpu_custom_call.1} parent=11 // pred_fallthru
          _
        // Predicated region
        $region49: #{tpu_custom_call.1} parent=11 // pred_check
          %p324 = pneg %p256
        $region50: #{tpu_custom_call.1} parent=11 // pred_check_branch
          %326 = sbr.rel (%p324) target = $region52
        $region51: #{tpu_custom_call.1} parent=11 // pred_region
          _
        $region52: #{tpu_custom_call.1} parent=11 // pred_fallthru
          _
      $region12: #{tpu_custom_call.1} parent=5 // pred_fallthru
        _
      %p327 = scmp.lt.s32.totalorder %s20, 2
      // Predicated region
      $region53: #{tpu_custom_call.1} parent=5 // pred_check
        %p328 = pneg %p327
      $region54: #{tpu_custom_call.1} parent=5 // pred_check_branch
        %330 = sbr.rel (%p328) target = $region56
      $region55: #{tpu_custom_call.1} parent=5 // pred_region
        // Predicated region
        $region57: #{tpu_custom_call.1} parent=55 // pred_check
          %p331 = pneg %p40
        $region58: #{tpu_custom_call.1} parent=55 // pred_check_branch
          %333 = sbr.rel (%p331) target = $region60
        $region59: #{tpu_custom_call.1} parent=55 // pred_region
          %s334 = smul.u32 4, %s20
          %p335 = scmp.lt.s32.totalorder %s334, 7
          %s336 = scalar_select %p335, %s334, 7
          %s337 = smul.addr %s336, 2
          %s338 = smul.addr %s337, 8
          %s339 = scalar_lea.vmem %s0, %s338
          %s340 = smul.u32 4, %s20
        $region60: #{tpu_custom_call.1} parent=55 // pred_fallthru
          _
      $region56: #{tpu_custom_call.1} parent=5 // pred_fallthru
        _
      %p341 = scmp.le.s32.totalorder 1, %s20
      %p342 = scmp.lt.s32.totalorder %s20, 3
      %p343 = pnand %p341, %p342
      %p344 = pneg %p343
      // Predicated region
      $region61: #{tpu_custom_call.1} parent=5 // pred_check
        _
      $region62: #{tpu_custom_call.1} parent=5 // pred_check_branch
        %346 = sbr.rel (%p343) target = $region64
      $region63: #{tpu_custom_call.1} parent=5 // pred_region
        %s347 = ssub.s32 %s20, 1
        %s348 = smul.u32 4, %s25
        %p349 = scmp.lt.s32.totalorder %s348, 7
        %s350 = scalar_select %p349, %s348, 7
        %s351 = smul.addr %s350, 2
        %s352 = smul.addr %s351, 8
        %s353 = scalar_lea.vmem %s0, %s352
        %p354 = pneg %p46
        %p355 = pneg %p43
        %p356 = pneg %p67
        %p357 = pneg %p64
        %p358 = pneg %p88
        %p359 = pneg %p85
        %p360 = pneg %p109
        %p361 = pneg %p106
        %p362 = pneg %p130
        %p363 = pneg %p127
        %p364 = pneg %p151
        %p365 = pneg %p148
        %p366 = pneg %p172
        %p367 = pneg %p169
        %p368 = pneg %p193
        %p369 = pneg %p190
        %p370 = pneg %p214
        %p371 = pneg %p211
        %p372 = pneg %p235
        %p373 = pneg %p232
        %p374 = pneg %p256
        %p375 = pneg %p253
        %p376 = pneg %p282
        %p377 = pneg %p279
        %s378 = sand.u32 %s269, 1
        %s379 = scalar_lea.sflag [#allocation3], %s378
        %s380 = sand.u32 %s269, 1
        %s381 = smul.addr %s380, 64
        %s382 = scalar_lea.vmem [#allocation2], %s381
        %s383 = smul.u32 4, %s25
        %p384 = scmp.lt.s32.totalorder %s383, 7
        %s385 = scalar_select %p384, %s383, 7
        %s386 = smul.addr %s385, 2
        %s387 = smul.addr %s386, 8
        %s388 = scalar_lea.vmem %s0, %s387
        %s389 = smul.u32 4, %s25
        %s390 = smul.u32 4, %s25
        %v391 = vld [vmem:[%s388] sm:$0xff]
        %v392 = vld [vmem:[%s388 + $0x8] sm:$0xff]
        %v393 = vld [vmem:[%s388 + $0x10] sm:$0xff]
        %v394 = vld [vmem:[%s388 + $0x18] sm:$0xff]
        %v395 = vld [vmem:[%s388 + $0x20] sm:$0xff]
        %v396 = vld [vmem:[%s388 + $0x28] sm:$0xff]
        %v397 = vld [vmem:[%s388 + $0x30] sm:$0xff]
        %v398 = vld [vmem:[%s388 + $0x38] sm:$0xff]
        %v399 = vld [vmem:[%s1] sm:$0xff]
        %v400 = vld [vmem:[%s1 + $0x8] sm:$0xff]
        %v401 = vld [vmem:[%s1 + $0x10] sm:$0xff]
        %v402 = vld [vmem:[%s1 + $0x18] sm:$0xff]
        %v403 = vld [vmem:[%s1 + $0x20] sm:$0xff]
        %v404 = vld [vmem:[%s1 + $0x28] sm:$0xff]
        %v405 = vld [vmem:[%s1 + $0x30] sm:$0xff]
        %v406 = vld [vmem:[%s1 + $0x38] sm:$0xff]
        %v407 = vld [vmem:[%s1 + $0x40] sm:$0xff]
        %v408 = vld [vmem:[%s1 + $0x48] sm:$0xff]
        %v409 = vld [vmem:[%s1 + $0x50] sm:$0xff]
        %v410 = vld [vmem:[%s1 + $0x58] sm:$0xff]
        %v411 = vld [vmem:[%s1 + $0x60] sm:$0xff]
        %v412 = vld [vmem:[%s1 + $0x68] sm:$0xff]
        %v413 = vld [vmem:[%s1 + $0x70] sm:$0xff]
        %v414 = vld [vmem:[%s1 + $0x78] sm:$0xff]
        %v415 = vld [vmem:[%s1 + $0x80] sm:$0xff]
        %v416 = vld [vmem:[%s1 + $0x88] sm:$0xff]
        %v417 = vld [vmem:[%s1 + $0x90] sm:$0xff]
        %v418 = vld [vmem:[%s1 + $0x98] sm:$0xff]
        %v419 = vld [vmem:[%s1 + $0xa0] sm:$0xff]
        %v420 = vld [vmem:[%s1 + $0xa8] sm:$0xff]
        %v421 = vld [vmem:[%s1 + $0xb0] sm:$0xff]
        %v422 = vld [vmem:[%s1 + $0xb8] sm:$0xff]
        %v423 = vld [vmem:[%s1 + $0xc0] sm:$0xff]
        %v424 = vld [vmem:[%s1 + $0xc8] sm:$0xff]
        %v425 = vld [vmem:[%s1 + $0xd0] sm:$0xff]
        %v426 = vld [vmem:[%s1 + $0xd8] sm:$0xff]
        %v427 = vld [vmem:[%s1 + $0xe0] sm:$0xff]
        %v428 = vld [vmem:[%s1 + $0xe8] sm:$0xff]
        %v429 = vld [vmem:[%s1 + $0xf0] sm:$0xff]
        %v430 = vld [vmem:[%s1 + $0xf8] sm:$0xff]
        %431 = vmatprep.subr.mxu0 0.0
        %432 = vmatpush1.msra.mxu0 %v399
        %433 = vmatprep.subr.mxu0 0.0
        %434 = vmatpush1.msra.mxu0 %v400
        %435 = vmatprep.subr.mxu0 0.0
        %436 = vmatpush1.msra.mxu0 %v401
        %437 = vmatprep.subr.mxu0 0.0
        %438 = vmatpush1.msra.mxu0 %v402
        %439 = vmatprep.subr.mxu0 0.0
        %440 = vmatpush1.msra.mxu0 %v403
        %441 = vmatprep.subr.mxu0 0.0
        %442 = vmatpush1.msra.mxu0 %v404
        %443 = vmatprep.subr.mxu0 0.0
        %444 = vmatpush1.msra.mxu0 %v405
        %445 = vmatprep.subr.mxu0 0.0
        %446 = vmatpush1.msra.mxu0 %v406
        %447 = vmatprep.subr.mxu0 0.0
        %448 = vmatpush1.msra.mxu0 %v407
        %449 = vmatprep.subr.mxu0 0.0
        %450 = vmatpush1.msra.mxu0 %v408
        %451 = vmatprep.subr.mxu0 0.0
        %452 = vmatpush1.msra.mxu0 %v409
        %453 = vmatprep.subr.mxu0 0.0
        %454 = vmatpush1.msra.mxu0 %v410
        %455 = vmatprep.subr.mxu0 0.0
        %456 = vmatpush1.msra.mxu0 %v411
        %457 = vmatprep.subr.mxu0 0.0
        %458 = vmatpush1.msra.mxu0 %v412
        %459 = vmatprep.subr.mxu0 0.0
        %460 = vmatpush1.msra.mxu0 %v413
        %461 = vmatprep.subr.mxu0 0.0
        %462 = vmatpush1.msra.mxu0 %v414
        %463 = vmatprep.subr.mxu0 0.0
        %464 = vmatpush1.msra.mxu0 %v415
        %465 = vmatprep.subr.mxu0 0.0
        %466 = vmatpush1.msra.mxu0 %v416
        %467 = vmatprep.subr.mxu0 0.0
        %468 = vmatpush1.msra.mxu0 %v417
        %469 = vmatprep.subr.mxu0 0.0
        %470 = vmatpush1.msra.mxu0 %v418
        %471 = vmatprep.subr.mxu0 0.0
        %472 = vmatpush1.msra.mxu0 %v419
        %473 = vmatprep.subr.mxu0 0.0
        %474 = vmatpush1.msra.mxu0 %v420
        %475 = vmatprep.subr.mxu0 0.0
        %476 = vmatpush1.msra.mxu0 %v421
        %477 = vmatprep.subr.mxu0 0.0
        %478 = vmatpush1.msra.mxu0 %v422
        %479 = vmatprep.subr.mxu0 0.0
        %480 = vmatpush1.msra.mxu0 %v423
        %481 = vmatprep.subr.mxu0 0.0
        %482 = vmatpush1.msra.mxu0 %v424
        %483 = vmatprep.subr.mxu0 0.0
        %484 = vmatpush1.msra.mxu0 %v425
        %485 = vmatprep.subr.mxu0 0.0
        %486 = vmatpush1.msra.mxu0 %v426
        %487 = vmatprep.subr.mxu0 0.0
        %488 = vmatpush1.msra.mxu0 %v427
        %489 = vmatprep.subr.mxu0 0.0
        %490 = vmatpush1.msra.mxu0 %v428
        %491 = vmatprep.subr.mxu0 0.0
        %492 = vmatpush1.msra.mxu0 %v429
        %493 = vmatprep.subr.mxu0 0.0
        %494 = vmatpush1.msra.mxu0 %v430
        %495 = vmatprep.mubr.f32.mxu0 %v392
        %496 = vmatmul.mubr.f32.gmra.mrb[0].mxu0 %v391
        %v497 = vpop.f32.mrb[0].mxu0
        %v498 = vadd.f32 0.0, %v497
        %v499 = vpop.f32.mrb[0].mxu0
        %500 = vmatprep.mubr.f32.mxu0 %v394
        %501 = vmatmul.mubr.f32.gmra.mrb[0].mxu0 %v393
        %v502 = vpop.f32.mrb[0].mxu0
        %v503 = vadd.f32 0.0, %v502
        %v504 = vpop.f32.mrb[0].mxu0
        %505 = vmatprep.mubr.f32.mxu0 %v396
        %506 = vmatmul.mubr.f32.gmra.mrb[0].mxu0 %v395
        %v507 = vpop.f32.mrb[0].mxu0
        %v508 = vadd.f32 0.0, %v507
        %v509 = vpop.f32.mrb[0].mxu0
        %510 = vmatprep.mubr.f32.mxu0 %v398
        %511 = vmatmul.mubr.f32.gmra.mrb[0].mxu0 %v397
        %v512 = vpop.f32.mrb[0].mxu0
        %v513 = vadd.f32 0.0, %v512
        %v514 = vpop.f32.mrb[0].mxu0
        %515 = vdwg.mxu0
        %v516 = vld [vmem:[%s2] sm:$0x1]
        %v518 = vlaneseq
        %v519 = vshrl.u32 %v518, 7
        %v520 = vsub.s32 0, %v519
        %v521 = vrot.slane %v516, %v520
        %v523 = vmul.f32 %v498, %v521
        %v524 = vmul.f32 %v503, %v521
        %v525 = vmul.f32 %v508, %v521
        %v526 = vmul.f32 %v513, %v521
        %v527 = vld [vmem:[%s5] sm:$0xff]
        %v528 = vld [vmem:[%s6] sm:$0xff]
        %530 = vset.pattern.permute.xlu0 0
        %531 = vperm.xlu0 %530, %v528
        %v532 = vpop.permute.xlu0 %531
        %vm534 = vcmask 261120
        %v536 = vsel %vm534, %v527, 0
        %538 = vmatprep.subr.mxu0 0.0
        %539 = vmatpush1.msra.mxu0 %v523
        %540 = vmatprep.subr.mxu0 0.0
        %541 = vmatpush1.msra.mxu0 %v524
        %542 = vmatprep.subr.mxu0 0.0
        %543 = vmatpush1.msra.mxu0 %v525
        %544 = vmatprep.subr.mxu0 0.0
        %545 = vmatpush1.msra.mxu0 %v526
        %546 = vmatprep.subr.mxu0 0.0
        %547 = vmatpush1.msra.mxu0 0.0
        %548 = vmatprep.subr.mxu0 0.0
        %549 = vmatpush1.msra.mxu0 0.0
        %550 = vmatprep.subr.mxu0 0.0
        %551 = vmatpush1.msra.mxu0 0.0
        %552 = vmatprep.subr.mxu0 0.0
        %553 = vmatpush1.msra.mxu0 0.0
        %554 = vmatprep.subr.mxu0 0.0
        %555 = vmatpush1.msra.mxu0 0.0
        %556 = vmatprep.subr.mxu0 0.0
        %557 = vmatpush1.msra.mxu0 0.0
        %558 = vmatprep.subr.mxu0 0.0
        %559 = vmatpush1.msra.mxu0 0.0
        %560 = vmatprep.subr.mxu0 0.0
        %561 = vmatpush1.msra.mxu0 0.0
        %562 = vmatprep.subr.mxu0 0.0
        %563 = vmatpush1.msra.mxu0 0.0
        %564 = vmatprep.subr.mxu0 0.0
        %565 = vmatpush1.msra.mxu0 0.0
        %566 = vmatprep.subr.mxu0 0.0
        %567 = vmatpush1.msra.mxu0 0.0
        %568 = vmatprep.subr.mxu0 0.0
        %569 = vmatpush1.msra.mxu0 0.0
        %570 = vmatprep.subr.mxu0 0.0
        %571 = vmatpush1.msra.mxu0 0.0
        %572 = vmatprep.subr.mxu0 0.0
        %573 = vmatpush1.msra.mxu0 0.0
        %574 = vmatprep.subr.mxu0 0.0
        %575 = vmatpush1.msra.mxu0 0.0
        %576 = vmatprep.subr.mxu0 0.0
        %577 = vmatpush1.msra.mxu0 0.0
        %578 = vmatprep.subr.mxu0 0.0
        %579 = vmatpush1.msra.mxu0 0.0
        %580 = vmatprep.subr.mxu0 0.0
        %581 = vmatpush1.msra.mxu0 0.0
        %582 = vmatprep.subr.mxu0 0.0
        %583 = vmatpush1.msra.mxu0 0.0
        %584 = vmatprep.subr.mxu0 0.0
        %585 = vmatpush1.msra.mxu0 0.0
        %586 = vmatprep.subr.mxu0 0.0
        %587 = vmatpush1.msra.mxu0 0.0
        %588 = vmatprep.subr.mxu0 0.0
        %589 = vmatpush1.msra.mxu0 0.0
        %590 = vmatprep.subr.mxu0 0.0
        %591 = vmatpush1.msra.mxu0 0.0
        %592 = vmatprep.subr.mxu0 0.0
        %593 = vmatpush1.msra.mxu0 0.0
        %594 = vmatprep.subr.mxu0 0.0
        %595 = vmatpush1.msra.mxu0 0.0
        %596 = vmatprep.subr.mxu0 0.0
        %597 = vmatpush1.msra.mxu0 0.0
        %598 = vmatprep.subr.mxu0 0.0
        %599 = vmatpush1.msra.mxu0 0.0
        %600 = vmatprep.subr.mxu0 0.0
        %601 = vmatpush1.msra.mxu0 0.0
        %602 = vmatprep.mubr.f32.mxu0 0.0
        %603 = vmatmul.mubr.f32.gmra.mrb[0].mxu0 %v536
        %v604 = vpop.f32.mrb[0].mxu0
        %v605 = vadd.f32 %v532, %v604
        %v606 = vpop.f32.mrb[0].mxu0
        %607 = vdwg.mxu0
        %v608 = vadd.f32 %v605, 3.0
        %v609 = vmax.f32 %v608, 0.0
        %v610 = vmin.f32 %v609, 6.0
        %v611 = vmul.f32 %v605, %v610
        %v612 = vmul.f32 %v611, 0.16666667
        %v613 = vld [vmem:[%s7] sm:$0xff]
        %v614 = vld [vmem:[%s7 + $0x8] sm:$0xff]
        %v615 = vld [vmem:[%s7 + $0x10] sm:$0xff]
        %v616 = vld [vmem:[%s7 + $0x18] sm:$0xff]
        %v617 = vld [vmem:[%s8] sm:$0xff]
        %v618 = vld [vmem:[%s8 + $0x8] sm:$0xff]
        %v619 = vld [vmem:[%s8 + $0x10] sm:$0xff]
        %v620 = vld [vmem:[%s8 + $0x18] sm:$0xff]
        %622 = vset.pattern.permute.xlu0 0
        %623 = vperm.xlu0 %622, %v617
        %v624 = vpop.permute.xlu0 %623
        %627 = vset.pattern.permute.xlu0 0
        %628 = vperm.xlu0 %627, %v618
        %v629 = vpop.permute.xlu0 %628
        %632 = vset.pattern.permute.xlu0 0
        %633 = vperm.xlu0 %632, %v619
        %v634 = vpop.permute.xlu0 %633
        %637 = vset.pattern.permute.xlu0 0
        %638 = vperm.xlu0 %637, %v620
        %v639 = vpop.permute.xlu0 %638
        %vm641 = vcmask 64512
        %v643 = vsel %vm641, %v613, 0
        %v646 = vsel %vm641, %v614, 0
        %v649 = vsel %vm641, %v615, 0
        %v652 = vsel %vm641, %v616, 0
        %654 = vmatprep.subr.mxu0 0.0
        %655 = vmatpush1.msra.mxu0 %v612
        %656 = vmatprep.subr.mxu0 0.0
        %657 = vmatpush1.msra.mxu0 0.0
        %658 = vmatprep.subr.mxu0 0.0
        %659 = vmatpush1.msra.mxu0 0.0
        %660 = vmatprep.subr.mxu0 0.0
        %661 = vmatpush1.msra.mxu0 0.0
        %662 = vmatprep.subr.mxu0 0.0
        %663 = vmatpush1.msra.mxu0 0.0
        %664 = vmatprep.subr.mxu0 0.0
        %665 = vmatpush1.msra.mxu0 0.0
        %666 = vmatprep.subr.mxu0 0.0
        %667 = vmatpush1.msra.mxu0 0.0
        %668 = vmatprep.subr.mxu0 0.0
        %669 = vmatpush1.msra.mxu0 0.0
        %670 = vmatprep.subr.mxu0 0.0
        %671 = vmatpush1.msra.mxu0 0.0
        %672 = vmatprep.subr.mxu0 0.0
        %673 = vmatpush1.msra.mxu0 0.0
        %674 = vmatprep.subr.mxu0 0.0
        %675 = vmatpush1.msra.mxu0 0.0
        %676 = vmatprep.subr.mxu0 0.0
        %677 = vmatpush1.msra.mxu0 0.0
        %678 = vmatprep.subr.mxu0 0.0
        %679 = vmatpush1.msra.mxu0 0.0
        %680 = vmatprep.subr.mxu0 0.0
        %681 = vmatpush1.msra.mxu0 0.0
        %682 = vmatprep.subr.mxu0 0.0
        %683 = vmatpush1.msra.mxu0 0.0
        %684 = vmatprep.subr.mxu0 0.0
        %685 = vmatpush1.msra.mxu0 0.0
        %686 = vmatprep.subr.mxu0 0.0
        %687 = vmatpush1.msra.mxu0 0.0
        %688 = vmatprep.subr.mxu0 0.0
        %689 = vmatpush1.msra.mxu0 0.0
        %690 = vmatprep.subr.mxu0 0.0
        %691 = vmatpush1.msra.mxu0 0.0
        %692 = vmatprep.subr.mxu0 0.0
        %693 = vmatpush1.msra.mxu0 0.0
        %694 = vmatprep.subr.mxu0 0.0
        %695 = vmatpush1.msra.mxu0 0.0
        %696 = vmatprep.subr.mxu0 0.0
        %697 = vmatpush1.msra.mxu0 0.0
        %698 = vmatprep.subr.mxu0 0.0
        %699 = vmatpush1.msra.mxu0 0.0
        %700 = vmatprep.subr.mxu0 0.0
        %701 = vmatpush1.msra.mxu0 0.0
        %702 = vmatprep.subr.mxu0 0.0
        %703 = vmatpush1.msra.mxu0 0.0
        %704 = vmatprep.subr.mxu0 0.0
        %705 = vmatpush1.msra.mxu0 0.0
        %706 = vmatprep.subr.mxu0 0.0
        %707 = vmatpush1.msra.mxu0 0.0
        %708 = vmatprep.subr.mxu0 0.0
        %709 = vmatpush1.msra.mxu0 0.0
        %710 = vmatprep.subr.mxu0 0.0
        %711 = vmatpush1.msra.mxu0 0.0
        %712 = vmatprep.subr.mxu0 0.0
        %713 = vmatpush1.msra.mxu0 0.0
        %714 = vmatprep.subr.mxu0 0.0
        %715 = vmatpush1.msra.mxu0 0.0
        %716 = vmatprep.subr.mxu0 0.0
        %717 = vmatpush1.msra.mxu0 0.0
        %718 = vmatprep.mubr.f32.mxu0 0.0
        %719 = vmatmul.mubr.f32.gmra.mrb[0].mxu0 %v643
        %v720 = vpop.f32.mrb[0].mxu0
        %v721 = vadd.f32 %v624, %v720
        %v722 = vpop.f32.mrb[0].mxu0
        %723 = vmatprep.mubr.f32.mxu0 0.0
        %724 = vmatmul.mubr.f32.gmra.mrb[0].mxu0 %v646
        %v725 = vpop.f32.mrb[0].mxu0
        %v726 = vadd.f32 %v629, %v725
        %v727 = vpop.f32.mrb[0].mxu0
        %728 = vmatprep.mubr.f32.mxu0 0.0
        %729 = vmatmul.mubr.f32.gmra.mrb[0].mxu0 %v649
        %v730 = vpop.f32.mrb[0].mxu0
        %v731 = vadd.f32 %v634, %v730
        %v732 = vpop.f32.mrb[0].mxu0
        %733 = vmatprep.mubr.f32.mxu0 0.0
        %734 = vmatmul.mubr.f32.gmra.mrb[0].mxu0 %v652
        %v735 = vpop.f32.mrb[0].mxu0
        %v736 = vadd.f32 %v639, %v735
        %v737 = vpop.f32.mrb[0].mxu0
        %738 = vdwg.mxu0
        %v739 = vxor.u32 %v721, 2147483648
        %v740 = vxor.u32 %v726, 2147483648
        %v741 = vxor.u32 %v731, 2147483648
        %v742 = vxor.u32 %v736, 2147483648
        %v743 = vmul.f32 %v739, 1.442695
        %v744 = vpow.pop %v743
        %v745 = vmul.f32 %v740, 1.442695
        %v746 = vpow.pop %v745
        %v747 = vmul.f32 %v741, 1.442695
        %v748 = vpow.pop %v747
        %v749 = vmul.f32 %v742, 1.442695
        %v750 = vpow.pop %v749
        %v751 = vadd.f32 %v744, 1.0
        %v752 = vadd.f32 %v746, 1.0
        %v753 = vadd.f32 %v748, 1.0
        %v754 = vadd.f32 %v750, 1.0
        %v755 = vrcp.pop %v751
        %v756 = vmul.f32 1.0, %v755
        %v757 = vrcp.pop %v752
        %v758 = vmul.f32 1.0, %v757
        %v759 = vrcp.pop %v753
        %v760 = vmul.f32 1.0, %v759
        %v761 = vrcp.pop %v754
        %v762 = vmul.f32 1.0, %v761
        %v763 = vld [vmem:[%s9] sm:$0xff]
        %v764 = vld [vmem:[%s9 + $0x8] sm:$0xff]
        %v765 = vld [vmem:[%s9 + $0x10] sm:$0xff]
        %v766 = vld [vmem:[%s9 + $0x18] sm:$0xff]
        %v767 = vld [vmem:[%s10] sm:$0xff]
        %v768 = vld [vmem:[%s10 + $0x8] sm:$0xff]
        %v769 = vld [vmem:[%s10 + $0x10] sm:$0xff]
        %v770 = vld [vmem:[%s10 + $0x18] sm:$0xff]
        %772 = vset.pattern.permute.xlu0 0
        %773 = vperm.xlu0 %772, %v767
        %v774 = vpop.permute.xlu0 %773
        %777 = vset.pattern.permute.xlu0 0
        %778 = vperm.xlu0 %777, %v768
        %v779 = vpop.permute.xlu0 %778
        %782 = vset.pattern.permute.xlu0 0
        %783 = vperm.xlu0 %782, %v769
        %v784 = vpop.permute.xlu0 %783
        %787 = vset.pattern.permute.xlu0 0
        %788 = vperm.xlu0 %787, %v770
        %v789 = vpop.permute.xlu0 %788
        %792 = vrot.lane.b32.xlu0 %v612, 112
        %v793 = vpop.permute.xlu0 %792
        %v796 = vsel %vm641, %v763, 0
        %v799 = vsel %vm641, %v764, 0
        %v802 = vsel %vm641, %v765, 0
        %v805 = vsel %vm641, %v766, 0
        %807 = vmatprep.subr.mxu0 0.0
        %808 = vmatpush1.msra.mxu0 %v793
        %809 = vmatprep.subr.mxu0 0.0
        %810 = vmatpush1.msra.mxu0 0.0
        %811 = vmatprep.subr.mxu0 0.0
        %812 = vmatpush1.msra.mxu0 0.0
        %813 = vmatprep.subr.mxu0 0.0
        %814 = vmatpush1.msra.mxu0 0.0
        %815 = vmatprep.subr.mxu0 0.0
        %816 = vmatpush1.msra.mxu0 0.0
        %817 = vmatprep.subr.mxu0 0.0
        %818 = vmatpush1.msra.mxu0 0.0
        %819 = vmatprep.subr.mxu0 0.0
        %820 = vmatpush1.msra.mxu0 0.0
        %821 = vmatprep.subr.mxu0 0.0
        %822 = vmatpush1.msra.mxu0 0.0
        %823 = vmatprep.subr.mxu0 0.0
        %824 = vmatpush1.msra.mxu0 0.0
        %825 = vmatprep.subr.mxu0 0.0
        %826 = vmatpush1.msra.mxu0 0.0
        %827 = vmatprep.subr.mxu0 0.0
        %828 = vmatpush1.msra.mxu0 0.0
        %829 = vmatprep.subr.mxu0 0.0
        %830 = vmatpush1.msra.mxu0 0.0
        %831 = vmatprep.subr.mxu0 0.0
        %832 = vmatpush1.msra.mxu0 0.0
        %833 = vmatprep.subr.mxu0 0.0
        %834 = vmatpush1.msra.mxu0 0.0
        %835 = vmatprep.subr.mxu0 0.0
        %836 = vmatpush1.msra.mxu0 0.0
        %837 = vmatprep.subr.mxu0 0.0
        %838 = vmatpush1.msra.mxu0 0.0
        %839 = vmatprep.subr.mxu0 0.0
        %840 = vmatpush1.msra.mxu0 0.0
        %841 = vmatprep.subr.mxu0 0.0
        %842 = vmatpush1.msra.mxu0 0.0
        %843 = vmatprep.subr.mxu0 0.0
        %844 = vmatpush1.msra.mxu0 0.0
        %845 = vmatprep.subr.mxu0 0.0
        %846 = vmatpush1.msra.mxu0 0.0
        %847 = vmatprep.subr.mxu0 0.0
        %848 = vmatpush1.msra.mxu0 0.0
        %849 = vmatprep.subr.mxu0 0.0
        %850 = vmatpush1.msra.mxu0 0.0
        %851 = vmatprep.subr.mxu0 0.0
        %852 = vmatpush1.msra.mxu0 0.0
        %853 = vmatprep.subr.mxu0 0.0
        %854 = vmatpush1.msra.mxu0 0.0
        %855 = vmatprep.subr.mxu0 0.0
        %856 = vmatpush1.msra.mxu0 0.0
        %857 = vmatprep.subr.mxu0 0.0
        %858 = vmatpush1.msra.mxu0 0.0
        %859 = vmatprep.subr.mxu0 0.0
        %860 = vmatpush1.msra.mxu0 0.0
        %861 = vmatprep.subr.mxu0 0.0
        %862 = vmatpush1.msra.mxu0 0.0
        %863 = vmatprep.subr.mxu0 0.0
        %864 = vmatpush1.msra.mxu0 0.0
        %865 = vmatprep.subr.mxu0 0.0
        %866 = vmatpush1.msra.mxu0 0.0
        %867 = vmatprep.subr.mxu0 0.0
        %868 = vmatpush1.msra.mxu0 0.0
        %869 = vmatprep.subr.mxu0 0.0
        %870 = vmatpush1.msra.mxu0 0.0
        %871 = vmatprep.mubr.f32.mxu0 0.0
        %872 = vmatmul.mubr.f32.gmra.mrb[0].mxu0 %v796
        %v873 = vpop.f32.mrb[0].mxu0
        %v874 = vadd.f32 %v774, %v873
        %v875 = vpop.f32.mrb[0].mxu0
        %876 = vmatprep.mubr.f32.mxu0 0.0
        %877 = vmatmul.mubr.f32.gmra.mrb[0].mxu0 %v799
        %v878 = vpop.f32.mrb[0].mxu0
        %v879 = vadd.f32 %v779, %v878
        %v880 = vpop.f32.mrb[0].mxu0
        %881 = vmatprep.mubr.f32.mxu0 0.0
        %882 = vmatmul.mubr.f32.gmra.mrb[0].mxu0 %v802
        %v883 = vpop.f32.mrb[0].mxu0
        %v884 = vadd.f32 %v784, %v883
        %v885 = vpop.f32.mrb[0].mxu0
        %886 = vmatprep.mubr.f32.mxu0 0.0
        %887 = vmatmul.mubr.f32.gmra.mrb[0].mxu0 %v805
        %v888 = vpop.f32.mrb[0].mxu0
        %v889 = vadd.f32 %v789, %v888
        %v890 = vpop.f32.mrb[0].mxu0
        %891 = vdwg.mxu0
        %v892 = vxor.u32 %v874, 2147483648
        %v893 = vxor.u32 %v879, 2147483648
        %v894 = vxor.u32 %v884, 2147483648
        %v895 = vxor.u32 %v889, 2147483648
        %v896 = vmul.f32 %v892, 1.442695
        %v897 = vpow.pop %v896
        %v898 = vmul.f32 %v893, 1.442695
        %v899 = vpow.pop %v898
        %v900 = vmul.f32 %v894, 1.442695
        %v901 = vpow.pop %v900
        %v902 = vmul.f32 %v895, 1.442695
        %v903 = vpow.pop %v902
        %v904 = vadd.f32 %v897, 1.0
        %v905 = vadd.f32 %v899, 1.0
        %v906 = vadd.f32 %v901, 1.0
        %v907 = vadd.f32 %v903, 1.0
        %v908 = vrcp.pop %v904
        %v909 = vmul.f32 1.0, %v908
        %v910 = vrcp.pop %v905
        %v911 = vmul.f32 1.0, %v910
        %v912 = vrcp.pop %v906
        %v913 = vmul.f32 1.0, %v912
        %v914 = vrcp.pop %v907
        %v915 = vmul.f32 1.0, %v914
        %v916 = vld [vmem:[%s3] sm:$0xff]
        %v917 = vld [vmem:[%s3 + $0x8] sm:$0xff]
        %v918 = vld [vmem:[%s3 + $0x10] sm:$0xff]
        %v919 = vld [vmem:[%s3 + $0x18] sm:$0xff]
        %vm920 = vcmask 130048
        %v922 = vsel %vm920, %v756, 0
        %v925 = vsel %vm920, %v758, 0
        %v928 = vsel %vm920, %v760, 0
        %v931 = vsel %vm920, %v762, 0
        %933 = vmatprep.subr.mxu0 %v917
        %934 = vmatpush1.msra.mxu0 %v916
        %935 = vmatprep.subr.mxu0 %v919
        %936 = vmatpush1.msra.mxu0 %v918
        %937 = vmatprep.subr.mxu0 0.0
        %938 = vmatpush1.msra.mxu0 0.0
        %939 = vmatprep.subr.mxu0 0.0
        %940 = vmatpush1.msra.mxu0 0.0
        %941 = vmatprep.subr.mxu0 0.0
        %942 = vmatpush1.msra.mxu0 0.0
        %943 = vmatprep.subr.mxu0 0.0
        %944 = vmatpush1.msra.mxu0 0.0
        %945 = vmatprep.subr.mxu0 0.0
        %946 = vmatpush1.msra.mxu0 0.0
        %947 = vmatprep.subr.mxu0 0.0
        %948 = vmatpush1.msra.mxu0 0.0
        %949 = vmatprep.subr.mxu0 0.0
        %950 = vmatpush1.msra.mxu0 0.0
        %951 = vmatprep.subr.mxu0 0.0
        %952 = vmatpush1.msra.mxu0 0.0
        %953 = vmatprep.subr.mxu0 0.0
        %954 = vmatpush1.msra.mxu0 0.0
        %955 = vmatprep.subr.mxu0 0.0
        %956 = vmatpush1.msra.mxu0 0.0
        %957 = vmatprep.subr.mxu0 0.0
        %958 = vmatpush1.msra.mxu0 0.0
        %959 = vmatprep.subr.mxu0 0.0
        %960 = vmatpush1.msra.mxu0 0.0
        %961 = vmatprep.subr.mxu0 0.0
        %962 = vmatpush1.msra.mxu0 0.0
        %963 = vmatprep.subr.mxu0 0.0
        %964 = vmatpush1.msra.mxu0 0.0
        %965 = vmatprep.subr.mxu0 0.0
        %966 = vmatpush1.msra.mxu0 0.0
        %967 = vmatprep.subr.mxu0 0.0
        %968 = vmatpush1.msra.mxu0 0.0
        %969 = vmatprep.subr.mxu0 0.0
        %970 = vmatpush1.msra.mxu0 0.0
        %971 = vmatprep.subr.mxu0 0.0
        %972 = vmatpush1.msra.mxu0 0.0
        %973 = vmatprep.subr.mxu0 0.0
        %974 = vmatpush1.msra.mxu0 0.0
        %975 = vmatprep.subr.mxu0 0.0
        %976 = vmatpush1.msra.mxu0 0.0
        %977 = vmatprep.subr.mxu0 0.0
        %978 = vmatpush1.msra.mxu0 0.0
        %979 = vmatprep.subr.mxu0 0.0
        %980 = vmatpush1.msra.mxu0 0.0
        %981 = vmatprep.subr.mxu0 0.0
        %982 = vmatpush1.msra.mxu0 0.0
        %983 = vmatprep.subr.mxu0 0.0
        %984 = vmatpush1.msra.mxu0 0.0
        %985 = vmatprep.subr.mxu0 0.0
        %986 = vmatpush1.msra.mxu0 0.0
        %987 = vmatprep.subr.mxu0 0.0
        %988 = vmatpush1.msra.mxu0 0.0
        %989 = vmatprep.subr.mxu0 0.0
        %990 = vmatpush1.msra.mxu0 0.0
        %991 = vmatprep.subr.mxu0 0.0
        %992 = vmatpush1.msra.mxu0 0.0
        %993 = vmatprep.subr.mxu0 0.0
        %994 = vmatpush1.msra.mxu0 0.0
        %995 = vmatprep.subr.mxu0 0.0
        %996 = vmatpush1.msra.mxu0 0.0
        %997 = vmatprep.mubr.f32.mxu0 0.0
        %998 = vmatmul.mubr.f32.gmra.mrb[0].mxu0 %v922
        %v999 = vpop.f32.mrb[0].mxu0
        %v1000 = vadd.f32 0.0, %v999
        %v1001 = vpop.f32.mrb[0].mxu0
        %v1002 = vadd.f32 0.0, %v1001
        %1003 = vmatprep.mubr.f32.mxu0 0.0
        %1004 = vmatmul.mubr.f32.gmra.mrb[0].mxu0 %v925
        %v1005 = vpop.f32.mrb[0].mxu0
        %v1006 = vadd.f32 0.0, %v1005
        %v1007 = vpop.f32.mrb[0].mxu0
        %v1008 = vadd.f32 0.0, %v1007
        %1009 = vmatprep.mubr.f32.mxu0 0.0
        %1010 = vmatmul.mubr.f32.gmra.mrb[0].mxu0 %v928
        %v1011 = vpop.f32.mrb[0].mxu0
        %v1012 = vadd.f32 0.0, %v1011
        %v1013 = vpop.f32.mrb[0].mxu0
        %v1014 = vadd.f32 0.0, %v1013
        %1015 = vmatprep.mubr.f32.mxu0 0.0
        %1016 = vmatmul.mubr.f32.gmra.mrb[0].mxu0 %v931
        %v1017 = vpop.f32.mrb[0].mxu0
        %v1018 = vadd.f32 0.0, %v1017
        %v1019 = vpop.f32.mrb[0].mxu0
        %v1020 = vadd.f32 0.0, %v1019
        %1021 = vdwg.mxu0
        %v1022 = vld [vmem:[%s4] sm:$0xff]
        %v1023 = vld [vmem:[%s4 + $0x8] sm:$0xff]
        %v1024 = vld [vmem:[%s4 + $0x10] sm:$0xff]
        %v1025 = vld [vmem:[%s4 + $0x18] sm:$0xff]
        %v1027 = vsel %vm920, %v909, 0
        %v1030 = vsel %vm920, %v911, 0
        %v1033 = vsel %vm920, %v913, 0
        %v1036 = vsel %vm920, %v915, 0
        %1038 = vmatprep.subr.mxu0 %v1023
        %1039 = vmatpush1.msra.mxu0 %v1022
        %1040 = vmatprep.subr.mxu0 %v1025
        %1041 = vmatpush1.msra.mxu0 %v1024
        %1042 = vmatprep.subr.mxu0 0.0
        %1043 = vmatpush1.msra.mxu0 0.0
        %1044 = vmatprep.subr.mxu0 0.0
        %1045 = vmatpush1.msra.mxu0 0.0
        %1046 = vmatprep.subr.mxu0 0.0
        %1047 = vmatpush1.msra.mxu0 0.0
        %1048 = vmatprep.subr.mxu0 0.0
        %1049 = vmatpush1.msra.mxu0 0.0
        %1050 = vmatprep.subr.mxu0 0.0
        %1051 = vmatpush1.msra.mxu0 0.0
        %1052 = vmatprep.subr.mxu0 0.0
        %1053 = vmatpush1.msra.mxu0 0.0
        %1054 = vmatprep.subr.mxu0 0.0
        %1055 = vmatpush1.msra.mxu0 0.0
        %1056 = vmatprep.subr.mxu0 0.0
        %1057 = vmatpush1.msra.mxu0 0.0
        %1058 = vmatprep.subr.mxu0 0.0
        %1059 = vmatpush1.msra.mxu0 0.0
        %1060 = vmatprep.subr.mxu0 0.0
        %1061 = vmatpush1.msra.mxu0 0.0
        %1062 = vmatprep.subr.mxu0 0.0
        %1063 = vmatpush1.msra.mxu0 0.0
        %1064 = vmatprep.subr.mxu0 0.0
        %1065 = vmatpush1.msra.mxu0 0.0
        %1066 = vmatprep.subr.mxu0 0.0
        %1067 = vmatpush1.msra.mxu0 0.0
        %1068 = vmatprep.subr.mxu0 0.0
        %1069 = vmatpush1.msra.mxu0 0.0
        %1070 = vmatprep.subr.mxu0 0.0
        %1071 = vmatpush1.msra.mxu0 0.0
        %1072 = vmatprep.subr.mxu0 0.0
        %1073 = vmatpush1.msra.mxu0 0.0
        %1074 = vmatprep.subr.mxu0 0.0
        %1075 = vmatpush1.msra.mxu0 0.0
        %1076 = vmatprep.subr.mxu0 0.0
        %1077 = vmatpush1.msra.mxu0 0.0
        %1078 = vmatprep.subr.mxu0 0.0
        %1079 = vmatpush1.msra.mxu0 0.0
        %1080 = vmatprep.subr.mxu0 0.0
        %1081 = vmatpush1.msra.mxu0 0.0
        %1082 = vmatprep.subr.mxu0 0.0
        %1083 = vmatpush1.msra.mxu0 0.0
        %1084 = vmatprep.subr.mxu0 0.0
        %1085 = vmatpush1.msra.mxu0 0.0
        %1086 = vmatprep.subr.mxu0 0.0
        %1087 = vmatpush1.msra.mxu0 0.0
        %1088 = vmatprep.subr.mxu0 0.0
        %1089 = vmatpush1.msra.mxu0 0.0
        %1090 = vmatprep.subr.mxu0 0.0
        %1091 = vmatpush1.msra.mxu0 0.0
        %1092 = vmatprep.subr.mxu0 0.0
        %1093 = vmatpush1.msra.mxu0 0.0
        %1094 = vmatprep.subr.mxu0 0.0
        %1095 = vmatpush1.msra.mxu0 0.0
        %1096 = vmatprep.subr.mxu0 0.0
        %1097 = vmatpush1.msra.mxu0 0.0
        %1098 = vmatprep.subr.mxu0 0.0
        %1099 = vmatpush1.msra.mxu0 0.0
        %1100 = vmatprep.subr.mxu0 0.0
        %1101 = vmatpush1.msra.mxu0 0.0
        %1102 = vmatprep.mubr.f32.mxu0 0.0
        %1103 = vmatmul.mubr.f32.gmra.mrb[0].mxu0 %v1027
        %v1104 = vpop.f32.mrb[0].mxu0
        %v1105 = vadd.f32 0.0, %v1104
        %v1106 = vpop.f32.mrb[0].mxu0
        %v1107 = vadd.f32 0.0, %v1106
        %1108 = vmatprep.mubr.f32.mxu0 0.0
        %1109 = vmatmul.mubr.f32.gmra.mrb[0].mxu0 %v1030
        %v1110 = vpop.f32.mrb[0].mxu0
        %v1111 = vadd.f32 0.0, %v1110
        %v1112 = vpop.f32.mrb[0].mxu0
        %v1113 = vadd.f32 0.0, %v1112
        %1114 = vmatprep.mubr.f32.mxu0 0.0
        %1115 = vmatmul.mubr.f32.gmra.mrb[0].mxu0 %v1033
        %v1116 = vpop.f32.mrb[0].mxu0
        %v1117 = vadd.f32 0.0, %v1116
        %v1118 = vpop.f32.mrb[0].mxu0
        %v1119 = vadd.f32 0.0, %v1118
        %1120 = vmatprep.mubr.f32.mxu0 0.0
        %1121 = vmatmul.mubr.f32.gmra.mrb[0].mxu0 %v1036
        %v1122 = vpop.f32.mrb[0].mxu0
        %v1123 = vadd.f32 0.0, %v1122
        %v1124 = vpop.f32.mrb[0].mxu0
        %v1125 = vadd.f32 0.0, %v1124
        %1126 = vdwg.mxu0
        %v1127 = vmul.f32 %v391, %v1105
        %v1128 = vmul.f32 %v392, %v1107
        %v1129 = vmul.f32 %v393, %v1111
        %v1130 = vmul.f32 %v394, %v1113
        %v1131 = vmul.f32 %v395, %v1117
        %v1132 = vmul.f32 %v396, %v1119
        %v1133 = vmul.f32 %v397, %v1123
        %v1134 = vmul.f32 %v398, %v1125
        %v1135 = vmul.f32 %v1127, %v1000
        %v1136 = vmul.f32 %v1128, %v1002
        %v1137 = vmul.f32 %v1129, %v1006
        %v1138 = vmul.f32 %v1130, %v1008
        %v1139 = vmul.f32 %v1131, %v1012
        %v1140 = vmul.f32 %v1132, %v1014
        %v1141 = vmul.f32 %v1133, %v1018
        %v1142 = vmul.f32 %v1134, %v1020
        %1143 = vst [vmem:[%s382] sm:$0xff] %v1135
        %1144 = vst [vmem:[%s382 + $0x8] sm:$0xff] %v1136
        %1145 = vst [vmem:[%s382 + $0x10] sm:$0xff] %v1137
        %1146 = vst [vmem:[%s382 + $0x18] sm:$0xff] %v1138
        %1147 = vst [vmem:[%s382 + $0x20] sm:$0xff] %v1139
        %1148 = vst [vmem:[%s382 + $0x28] sm:$0xff] %v1140
        %1149 = vst [vmem:[%s382 + $0x30] sm:$0xff] %v1141
        %1150 = vst [vmem:[%s382 + $0x38] sm:$0xff] %v1142
        %s1151 = sand.u32 %s269, 1
        %s1152 = scalar_lea.sflag [#allocation3], %s1151
        %s1153 = sand.u32 %s269, 1
        %s1154 = smul.addr %s1153, 64
        %s1155 = scalar_lea.vmem [#allocation2], %s1154
        // Predicated region
        $region65: #{tpu_custom_call.1} parent=63 // pred_check
          %p1156 = pneg %p279
        $region66: #{tpu_custom_call.1} parent=63 // pred_check_branch
          %1158 = sbr.rel (%p1156) target = $region68
        $region67: #{tpu_custom_call.1} parent=63 // pred_region
          %s1159 = smul.u32 4, %s25
          %s1161 = ssub.s32 1024, 1024
          %1162 = vsyncadd %s1152, %s1161
          %s1163 = smul.addr %s1159, 2
          %s1164 = smul.addr %s1163, 128
          %s1165 = scalar_lea.hbm %s11, %s1164
          %s1166 = sshll.u32 %s1155, 4
          %s1167 = int_to_ptr.vmem [resolvable:$true] %s1166
          %1172 = dma.vmem_to_hbm [thread:$0]  %s1167, 1024, %s1165, %s1152, 256, 256, 16
        $region68: #{tpu_custom_call.1} parent=63 // pred_fallthru
          _
      $region64: #{tpu_custom_call.1} parent=5 // pred_fallthru
        _
      %p1173 = scmp.le.s32.totalorder 2, %s20
      // Predicated region
      $region69: #{tpu_custom_call.1} parent=5 // pred_check
        %p1174 = pneg %p1173
      $region70: #{tpu_custom_call.1} parent=5 // pred_check_branch
        %1176 = sbr.rel (%p1174) target = $region72
      $region71: #{tpu_custom_call.1} parent=5 // pred_region
        %s1177 = ssub.s32 %s20, 2
        // Predicated region
        $region73: #{tpu_custom_call.1} parent=71 // pred_check
          %p1178 = pneg %p285
        $region74: #{tpu_custom_call.1} parent=71 // pred_check_branch
          %1180 = sbr.rel (%p1178) target = $region76
        $region75: #{tpu_custom_call.1} parent=71 // pred_region
          %s1181 = sand.u32 %s270, 1
          %s1182 = scalar_lea.sflag [#allocation3], %s1181
          %s1183 = sand.u32 %s270, 1
          %s1184 = smul.addr %s1183, 64
          %s1185 = scalar_lea.vmem [#allocation2], %s1184
          %1186 = dma.done %s1182, 1024
        $region76: #{tpu_custom_call.1} parent=71 // pred_fallthru
          _
      $region72: #{tpu_custom_call.1} parent=5 // pred_fallthru
        _
    $region6: #{tpu_custom_call.1} parent=1 // loop_footer
      %s24 = sadd.s32 1, %s20
    $region7: #{tpu_custom_call.1} parent=1 // loop_footer_branch
      %19 = sbr.rel target = $region3
    $region8: #{tpu_custom_call.1} parent=1 // loop_exit
      _
    %1187 = vsyncpa [#allocation3], 1
    %s1188 = scalar_lea.sflag [#allocation3], 1
    %1189 = vsyncpa %s1188, 1

</llo_original>
